<compile_context>
chip_gen: v7x
topology: tpu7x:2x2x1
jax: 0.10.0
libtpu: 0.0.40
codegen_flags: <defaults>
</compile_context>

<pallas_src>
from functools import partial

import jax
import jax.numpy as jnp
from jax.experimental import pallas as pl
from jax.experimental.pallas import tpu as pltpu


def _round_up(x, m):
    return (x + m - 1) // m * m


def _prototype_kernel(s_ref, oh_ref, p_ref):
    """One-shot producer of L2-normalized class prototypes in (Dp, Cp) layout.

    s_ref:  (Sp, Dp)      support features (input dtype)
    oh_ref: (Sp, Cp) f32  one-hot class membership
    p_ref:  (Dp, Cp)      normalized prototypes^T, in the MXU operand dtype
    """
    sup = s_ref[...].astype(jnp.float32)                       # (Sp, Dp)
    oh = oh_ref[...]                                            # (Sp, Cp)
    # protos^T = sup^T . oh  (contract the support axis of both operands).
    # The 1/count of the per-class mean cancels under the L2 normalization.
    pt = jax.lax.dot_general(
        sup, oh,
        dimension_numbers=(((0,), (0,)), ((), ())),
        preferred_element_type=jnp.float32)                     # (Dp, Cp)
    # F.normalize(x) == x * rsqrt(max(||x||^2, 1e-24)); per-class (column) norm.
    inv = jax.lax.rsqrt(
        jnp.maximum(jnp.sum(pt * pt, axis=0, keepdims=True), 1e-24))
    p_ref[...] = (pt * inv).astype(p_ref.dtype)


def _cosine_sim_kernel(scale_ref, q_ref, p_ref, out_ref, *, inv_temperature):
    """Streaming GEMM over query tiles.

    scale_ref: (1, 1) f32 SMEM   learnable scale
    q_ref:     (tq, Dp)   VMEM   query-feature tile (input dtype)
    p_ref:     (Dp, Cp)   VMEM   normalized prototypes^T (resident, tiny)
    out_ref:   (tq, Cp)   VMEM   scaled cosine logits (f32)
    """
    q = q_ref[...].astype(jnp.float32)                          # (tq, Dp)
    q_inv = jax.lax.rsqrt(
        jnp.maximum(jnp.sum(q * q, axis=1, keepdims=True), 1e-24))
    qn = (q * q_inv).astype(p_ref.dtype)                        # MXU operand dtype

    sim = jax.lax.dot_general(
        qn, p_ref[...],
        dimension_numbers=(((1,), (0,)), ((), ())),
        preferred_element_type=jnp.float32)                     # (tq, Cp) f32

    # scale / temperature applied in the f32 epilogue (keeps bf16 operands clean).
    coef = scale_ref[0, 0] * inv_temperature
    out_ref[...] = (sim * coef).astype(out_ref.dtype)


def cosine_classifier(query_feat, support_feat, support_labels, scale,
                      *, num_classes, temperature=0.07, q_tile=256,
                      mxu_dtype=None):
    """Pallas implementation of CosineClassifier.forward.

    num_classes must equal the number of distinct values in support_labels.
    mxu_dtype controls the dtype of the final matmul operands; by default it
    follows the query-feature dtype (pass bf16 features for native MXU rate).
    """
    query_feat = jnp.asarray(query_feat)
    support_feat = jnp.asarray(support_feat)
    Q, D = query_feat.shape
    S, D2 = support_feat.shape
    assert D == D2
    if mxu_dtype is None:
        mxu_dtype = query_feat.dtype

    # Glue (plain JAX): sorted unique labels -> one-hot membership (S, C).
    unique_labels = jnp.unique(support_labels, size=num_classes)
    one_hot = (support_labels[:, None] == unique_labels[None, :]).astype(jnp.float32)

    # Lane / sublane friendly zero padding (exact: padded feature columns add 0
    # to norms/dots, padded support rows are all-zero, padded class columns give
    # zero prototypes -> zero logits, padded query rows give zero logits).
    Dp = _round_up(D, 128)
    Cp = _round_up(num_classes, 128)
    Sp = _round_up(S, 8)
    tq = min(q_tile, _round_up(Q, 8))
    Qp = _round_up(Q, tq)

    qf = jnp.zeros((Qp, Dp), query_feat.dtype).at[:Q, :D].set(query_feat)
    sf = jnp.zeros((Sp, Dp), support_feat.dtype).at[:S, :D].set(support_feat)
    oh = jnp.zeros((Sp, Cp), jnp.float32).at[:S, :num_classes].set(one_hot)

    # --- One-shot producer: grid-invariant prototype work is paid exactly once.
    protos_t = pl.pallas_call(
        _prototype_kernel,
        out_shape=jax.ShapeDtypeStruct((Dp, Cp), mxu_dtype),
        grid=(1,),
        in_specs=[
            pl.BlockSpec((Sp, Dp), lambda i: (0, 0)),
            pl.BlockSpec((Sp, Cp), lambda i: (0, 0)),
        ],
        out_specs=pl.BlockSpec((Dp, Cp), lambda i: (0, 0)),
    )(sf, oh)

    scale_arr = jnp.asarray(scale, jnp.float32).reshape(1, 1)

    # --- Streaming GEMM over query tiles ("parallel" -> megacore sharding).
    out = pl.pallas_call(
        partial(_cosine_sim_kernel,
                inv_temperature=float(1.0 / temperature)),
        out_shape=jax.ShapeDtypeStruct((Qp, Cp), jnp.float32),
        grid=(Qp // tq,),
        in_specs=[
            pl.BlockSpec(memory_space=pltpu.MemorySpace.SMEM),   # scale (1,1)
            pl.BlockSpec((tq, Dp), lambda i: (i, 0)),            # query tile
            pl.BlockSpec((Dp, Cp), lambda i: (0, 0)),            # prototypes (tiny, resident)
        ],
        out_specs=pl.BlockSpec((tq, Cp), lambda i: (i, 0)),
        compiler_params=pltpu.CompilerParams(
            dimension_semantics=("parallel",)),
    )(scale_arr, qf, protos_t)

    return out[:Q, :num_classes]


def _reference(query_feat, support_feat, support_labels, scale, num_classes,
               temperature=0.07):
    """Pure-JAX reference mirroring the PyTorch module."""
    unique_labels = jnp.unique(support_labels, size=num_classes)
    protos = []
    for c in range(num_classes):
        mask = (support_labels == unique_labels[c]).astype(jnp.float32)
        proto = (support_feat * mask[:, None]).sum(0) / mask.sum()
        protos.append(proto)
    protos = jnp.stack(protos)
    qn = query_feat / jnp.maximum(
        jnp.linalg.norm(query_feat, axis=1, keepdims=True), 1e-12)
    pn = protos / jnp.maximum(
        jnp.linalg.norm(protos, axis=1, keepdims=True), 1e-12)
    sim = qn @ pn.T / temperature
    return scale * sim


if __name__ == "__main__":
    key = jax.random.PRNGKey(0)
    kq, ks = jax.random.split(key)

    Q, S, D, C = 8, 16, 32, 4   # small few-shot episode: 4-way, 4-shot, 8 queries
    query_feat = jax.random.normal(kq, (Q, D), dtype=jnp.float32)
    support_feat = jax.random.normal(ks, (S, D), dtype=jnp.float32)
    support_labels = jnp.arange(S, dtype=jnp.int32) % C   # every class present
    scale = 10.0                                           # nn.Parameter(torch.tensor(10.0))
    temperature = 0.07

    # f32 path (MXU operand dtype follows the feature dtype).
    out = cosine_classifier(query_feat, support_feat, support_labels, scale,
                            num_classes=C, temperature=temperature)
    out = jax.block_until_ready(out)
    ref = _reference(query_feat, support_feat, support_labels, scale, C, temperature)
    assert out.shape == (Q, C)
    assert jnp.allclose(out, ref, atol=1e-3, rtol=1e-3), "f32 mismatch vs reference"

    # bf16 path: half the DMA bytes, native-rate MXU operands, f32 accumulation.
    q_bf = query_feat.astype(jnp.bfloat16)
    s_bf = support_feat.astype(jnp.bfloat16)
    out_bf = cosine_classifier(q_bf, s_bf, support_labels, scale,
                               num_classes=C, temperature=temperature)
    out_bf = jax.block_until_ready(out_bf)
    ref_bf = _reference(q_bf.astype(jnp.float32), s_bf.astype(jnp.float32),
                        support_labels, scale, C, temperature)
    assert out_bf.shape == (Q, C)
    assert jnp.allclose(out_bf, ref_bf, atol=2.0, rtol=2e-2), \
        "bf16 mismatch vs reference"

    print("KERNEL_OK")
</pallas_src>

<mosaic_0001>
module attributes {stable_mosaic.version = 11 : i64} {
  func.func @_prototype_kernel(%arg0: i32, %arg1: memref<16x128xf32, #tpu.memory_space<vmem>>, %arg2: memref<16x128xf32, #tpu.memory_space<vmem>>, %arg3: memref<128x128xf32, #tpu.memory_space<vmem>>) attributes {dimension_semantics = [#tpu.dimension_semantics<arbitrary>], iteration_bounds = array<i64: 1>, scalar_prefetch = 0 : i64, scratch_operands = 0 : i64, tpu.core_type = #tpu.core_type<tc>, window_params = [{pipeline_mode = #tpu.pipeline_mode<synchronous>, transform_indices = @transform_0, window_bounds = array<i64: 16, 128>}, {pipeline_mode = #tpu.pipeline_mode<synchronous>, transform_indices = @transform_1, window_bounds = array<i64: 16, 128>}, {pipeline_mode = #tpu.pipeline_mode<synchronous>, transform_indices = @transform_2, window_bounds = array<i64: 128, 128>}]} {
    %c0 = arith.constant 0 : index
    %c0_0 = arith.constant 0 : index
    %0 = vector.load %arg1[%c0, %c0_0] : memref<16x128xf32, #tpu.memory_space<vmem>>, vector<16x128xf32>
    %c0_1 = arith.constant 0 : index
    %c0_2 = arith.constant 0 : index
    %1 = vector.load %arg2[%c0_1, %c0_2] : memref<16x128xf32, #tpu.memory_space<vmem>>, vector<16x128xf32>
    %cst = arith.constant dense<0.000000e+00> : vector<128x128xf32>
    %2 = tpu.matmul %0, %1, %cst {dimension_numbers = #tpu.dot_dimension_numbers<[0], [0], [1], [1], [0, 1, 1, 1], [], []>} : vector<16x128xf32>, vector<16x128xf32>, vector<128x128xf32> -> vector<128x128xf32>
    %3 = arith.mulf %2, %2 : vector<128x128xf32>
    %cst_3 = arith.constant dense<0.000000e+00> : vector<128xf32>
    %4 = vector.multi_reduction <add>, %3, %cst_3 [0] : vector<128x128xf32> to vector<128xf32>
    %5 = vector.shape_cast %4 : vector<128xf32> to vector<1x128xf32>
    %cst_4 = arith.constant 1.000000e-24 : f32
    %6 = vector.broadcast %cst_4 : f32 to vector<1x128xf32>
    %7 = arith.maximumf %5, %6 : vector<1x128xf32>
    %8 = math.rsqrt %7 : vector<1x128xf32>
    %9 = vector.broadcast %8 : vector<1x128xf32> to vector<128x128xf32>
    %10 = arith.mulf %2, %9 : vector<128x128xf32>
    %c0_5 = arith.constant 0 : index
    %c0_6 = arith.constant 0 : index
    %11 = vector.load %arg3[%c0_5, %c0_6] : memref<128x128xf32, #tpu.memory_space<vmem>>, vector<128x128xf32>
    tpu.vector_store %arg3[%c0_5, %c0_6], %10 {strides = array<i32>} : memref<128x128xf32, #tpu.memory_space<vmem>>, vector<128x128xf32>,
    return
  }
  func.func @transform_0(%arg0: i32) -> (i32, i32) {
    %c0_i32 = arith.constant 0 : i32
    %c0_i32_0 = arith.constant 0 : i32
    %c0_i32_1 = arith.constant 0 : i32
    return %c0_i32, %c0_i32_0 : i32, i32
  }
  func.func @transform_1(%arg0: i32) -> (i32, i32) {
    %c0_i32 = arith.constant 0 : i32
    %c0_i32_0 = arith.constant 0 : i32
    %c0_i32_1 = arith.constant 0 : i32
    return %c0_i32, %c0_i32_0 : i32, i32
  }
  func.func @transform_2(%arg0: i32) -> (i32, i32) {
    %c0_i32 = arith.constant 0 : i32
    %c0_i32_0 = arith.constant 0 : i32
    %c0_i32_1 = arith.constant 0 : i32
    return %c0_i32, %c0_i32_0 : i32, i32
  }
}

</mosaic_0001>

<llo_original>
// kernel: tpu_custom_call.1
$region0: #{tpu_custom_call.1}
  #allocation0 [shape = 'u32[]', space=smem, size = 0x4, offset = 0x4, fixed_abs, tag = 'smem constant byte address 0x4 - core index']
  #allocation1 [shape = 'u32[144,128]{1,0:T(1,128)}', space=vmem, size = 0x12000, scoped, tag = 'internal scratch']
  %s0 = inlined_call_operand.hbm [shape: f32[16,128], index: 0, kind: input, shape index: {}]
  %s1 = inlined_call_operand.hbm [shape: f32[16,128], index: 1, kind: input, shape index: {}]
  %s2 = inlined_call_operand.hbm [shape: f32[128,128], index: 2, kind: output, shape index: {}]
  %s3 = sld [smem:[#allocation0]]
  $region26: #{tpu_custom_call.1} parent=0
    _
  %s5 = ssub.s32 1, %s3
  %s6 = scalar_select 0, %s5, %s3
  $region1: #{tpu_custom_call.1} parent=0
    #allocation2 [shape = 'u8[8192]{0}', space=vmem, size = 0x2000, scoped, tag = 'input window, operand 0, single buffered']
    #allocation3 [shape = 's32[1]{0}', space=sflag, size = 0x4, scoped, tag = 'scoped memory for tpu_custom_call.1']
    #allocation4 [shape = 's32[1]{0}', space=sflag, size = 0x4, scoped, tag = 'scoped memory for tpu_custom_call.1']
    #allocation5 [shape = 'u8[8192]{0}', space=vmem, size = 0x2000, scoped, tag = 'input window, operand 1, single buffered']
    #allocation6 [shape = 's32[1]{0}', space=sflag, size = 0x4, scoped, tag = 'scoped memory for tpu_custom_call.1']
    #allocation7 [shape = 'u8[65536]{0}', space=vmem, size = 0x10000, scoped, tag = 'output window, operand 0, single buffered']
    %7 = vsyncpa [#allocation3], 0
    %8 = vsyncpa [#allocation6], 0
    %9 = vsyncpa [#allocation4], 0
    // Predicated region
    $region2: #{tpu_custom_call.1} parent=1 // pred_check
      _
    $region3: #{tpu_custom_call.1} parent=1 // pred_check_branch
      %11 = sbr.rel (0) target = $region5
    $region4: #{tpu_custom_call.1} parent=1 // pred_region
      %s13 = ssub.s32 256, 256
      %14 = vsyncadd [#allocation3], %s13
      %s15 = sshll.u32 [#allocation2], 4
      %s16 = int_to_ptr.vmem [resolvable:$true] %s15
      %21 = dma.hbm_to_vmem [thread:$0]  %s0, 256, %s16, [#allocation3], 128, 128, 8
    $region5: #{tpu_custom_call.1} parent=1 // pred_fallthru
      _
    // Predicated region
    $region6: #{tpu_custom_call.1} parent=1 // pred_check
      _
    $region7: #{tpu_custom_call.1} parent=1 // pred_check_branch
      %23 = sbr.rel (0) target = $region9
    $region8: #{tpu_custom_call.1} parent=1 // pred_region
      %s25 = ssub.s32 256, 256
      %26 = vsyncadd [#allocation6], %s25
      %s27 = sshll.u32 [#allocation5], 4
      %s28 = int_to_ptr.vmem [resolvable:$true] %s27
      %33 = dma.hbm_to_vmem [thread:$0]  %s1, 256, %s28, [#allocation6], 128, 128, 8
    $region9: #{tpu_custom_call.1} parent=1 // pred_fallthru
      _
    // Predicated region
    $region10: #{tpu_custom_call.1} parent=1 // pred_check
      _
    $region11: #{tpu_custom_call.1} parent=1 // pred_check_branch
      %35 = sbr.rel (0) target = $region13
    $region12: #{tpu_custom_call.1} parent=1 // pred_region
      %36 = dma.done [#allocation3], 256
    $region13: #{tpu_custom_call.1} parent=1 // pred_fallthru
      _
    // Predicated region
    $region14: #{tpu_custom_call.1} parent=1 // pred_check
      _
    $region15: #{tpu_custom_call.1} parent=1 // pred_check_branch
      %38 = sbr.rel (0) target = $region17
    $region16: #{tpu_custom_call.1} parent=1 // pred_region
      %39 = dma.done [#allocation6], 256
    $region17: #{tpu_custom_call.1} parent=1 // pred_fallthru
      _
    %v40 = vld [vmem:[#allocation2] sm:$0xff]
    %v41 = vld [vmem:[#allocation2 + $0x8] sm:$0xff]
    %v42 = vld [vmem:[#allocation5] sm:$0xff]
    %v43 = vld [vmem:[#allocation5 + $0x8] sm:$0xff]
    %44 = vxpose.xlu0.b32.start [1/16] %v40, 128
    %45 = vxpose.xlu0.b32.cont [2/16] %v41, 128
    %46 = vxpose.xlu0.b32.cont [3/16] 0.0, 128
    %47 = vxpose.xlu0.b32.cont [4/16] 0.0, 128
    %48 = vxpose.xlu0.b32.cont [5/16] 0.0, 128
    %49 = vxpose.xlu0.b32.cont [6/16] 0.0, 128
    %50 = vxpose.xlu0.b32.cont [7/16] 0.0, 128
    %51 = vxpose.xlu0.b32.cont [8/16] 0.0, 128
    %52 = vxpose.xlu0.b32.cont [9/16] 0.0, 128
    %53 = vxpose.xlu0.b32.cont [10/16] 0.0, 128
    %54 = vxpose.xlu0.b32.cont [11/16] 0.0, 128
    %55 = vxpose.xlu0.b32.cont [12/16] 0.0, 128
    %56 = vxpose.xlu0.b32.cont [13/16] 0.0, 128
    %57 = vxpose.xlu0.b32.cont [14/16] 0.0, 128
    %58 = vxpose.xlu0.b32.cont [15/16] 0.0, 128
    %59 = vxpose.xlu0.b32.end [16/16] 0.0, 128
    %v60 = vpop.trf.xlu0
    %v61 = vpop.trf.xlu0
    %v62 = vpop.trf.xlu0
    %v63 = vpop.trf.xlu0
    %v64 = vpop.trf.xlu0
    %v65 = vpop.trf.xlu0
    %v66 = vpop.trf.xlu0
    %v67 = vpop.trf.xlu0
    %v68 = vpop.trf.xlu0
    %v69 = vpop.trf.xlu0
    %v70 = vpop.trf.xlu0
    %v71 = vpop.trf.xlu0
    %v72 = vpop.trf.xlu0
    %v73 = vpop.trf.xlu0
    %v74 = vpop.trf.xlu0
    %v75 = vpop.trf.xlu0
    %vm76 = vcmask 130048
    %v78 = vsel %vm76, %v60, 0
    %v81 = vsel %vm76, %v61, 0
    %v84 = vsel %vm76, %v62, 0
    %v87 = vsel %vm76, %v63, 0
    %v90 = vsel %vm76, %v64, 0
    %v93 = vsel %vm76, %v65, 0
    %v96 = vsel %vm76, %v66, 0
    %v99 = vsel %vm76, %v67, 0
    %v102 = vsel %vm76, %v68, 0
    %v105 = vsel %vm76, %v69, 0
    %v108 = vsel %vm76, %v70, 0
    %v111 = vsel %vm76, %v71, 0
    %v114 = vsel %vm76, %v72, 0
    %v117 = vsel %vm76, %v73, 0
    %v120 = vsel %vm76, %v74, 0
    %v123 = vsel %vm76, %v75, 0
    %125 = vmatprep.subr.mxu0 0.0
    %126 = vmatpush1.msra.mxu0 %v42
    %127 = vmatprep.subr.mxu0 0.0
    %128 = vmatpush1.msra.mxu0 %v43
    %129 = vmatprep.subr.mxu0 0.0
    %130 = vmatpush1.msra.mxu0 0.0
    %131 = vmatprep.subr.mxu0 0.0
    %132 = vmatpush1.msra.mxu0 0.0
    %133 = vmatprep.subr.mxu0 0.0
    %134 = vmatpush1.msra.mxu0 0.0
    %135 = vmatprep.subr.mxu0 0.0
    %136 = vmatpush1.msra.mxu0 0.0
    %137 = vmatprep.subr.mxu0 0.0
    %138 = vmatpush1.msra.mxu0 0.0
    %139 = vmatprep.subr.mxu0 0.0
    %140 = vmatpush1.msra.mxu0 0.0
    %141 = vmatprep.subr.mxu0 0.0
    %142 = vmatpush1.msra.mxu0 0.0
    %143 = vmatprep.subr.mxu0 0.0
    %144 = vmatpush1.msra.mxu0 0.0
    %145 = vmatprep.subr.mxu0 0.0
    %146 = vmatpush1.msra.mxu0 0.0
    %147 = vmatprep.subr.mxu0 0.0
    %148 = vmatpush1.msra.mxu0 0.0
    %149 = vmatprep.subr.mxu0 0.0
    %150 = vmatpush1.msra.mxu0 0.0
    %151 = vmatprep.subr.mxu0 0.0
    %152 = vmatpush1.msra.mxu0 0.0
    %153 = vmatprep.subr.mxu0 0.0
    %154 = vmatpush1.msra.mxu0 0.0
    %155 = vmatprep.subr.mxu0 0.0
    %156 = vmatpush1.msra.mxu0 0.0
    %157 = vmatprep.subr.mxu0 0.0
    %158 = vmatpush1.msra.mxu0 0.0
    %159 = vmatprep.subr.mxu0 0.0
    %160 = vmatpush1.msra.mxu0 0.0
    %161 = vmatprep.subr.mxu0 0.0
    %162 = vmatpush1.msra.mxu0 0.0
    %163 = vmatprep.subr.mxu0 0.0
    %164 = vmatpush1.msra.mxu0 0.0
    %165 = vmatprep.subr.mxu0 0.0
    %166 = vmatpush1.msra.mxu0 0.0
    %167 = vmatprep.subr.mxu0 0.0
    %168 = vmatpush1.msra.mxu0 0.0
    %169 = vmatprep.subr.mxu0 0.0
    %170 = vmatpush1.msra.mxu0 0.0
    %171 = vmatprep.subr.mxu0 0.0
    %172 = vmatpush1.msra.mxu0 0.0
    %173 = vmatprep.subr.mxu0 0.0
    %174 = vmatpush1.msra.mxu0 0.0
    %175 = vmatprep.subr.mxu0 0.0
    %176 = vmatpush1.msra.mxu0 0.0
    %177 = vmatprep.subr.mxu0 0.0
    %178 = vmatpush1.msra.mxu0 0.0
    %179 = vmatprep.subr.mxu0 0.0
    %180 = vmatpush1.msra.mxu0 0.0
    %181 = vmatprep.subr.mxu0 0.0
    %182 = vmatpush1.msra.mxu0 0.0
    %183 = vmatprep.subr.mxu0 0.0
    %184 = vmatpush1.msra.mxu0 0.0
    %185 = vmatprep.subr.mxu0 0.0
    %186 = vmatpush1.msra.mxu0 0.0
    %187 = vmatprep.subr.mxu0 0.0
    %188 = vmatpush1.msra.mxu0 0.0
    %189 = vmatprep.mubr.f32.mxu0 0.0
    %190 = vmatmul.mubr.f32.gmra.mrb[0].mxu0 %v78
    %v191 = vpop.f32.mrb[0].mxu0
    %v192 = vadd.f32 0.0, %v191
    %v193 = vpop.f32.mrb[0].mxu0
    %194 = vmatprep.mubr.f32.mxu0 0.0
    %195 = vmatmul.mubr.f32.gmra.mrb[0].mxu0 %v81
    %v196 = vpop.f32.mrb[0].mxu0
    %v197 = vadd.f32 0.0, %v196
    %v198 = vpop.f32.mrb[0].mxu0
    %199 = vmatprep.mubr.f32.mxu0 0.0
    %200 = vmatmul.mubr.f32.gmra.mrb[0].mxu0 %v84
    %v201 = vpop.f32.mrb[0].mxu0
    %v202 = vadd.f32 0.0, %v201
    %v203 = vpop.f32.mrb[0].mxu0
    %204 = vmatprep.mubr.f32.mxu0 0.0
    %205 = vmatmul.mubr.f32.gmra.mrb[0].mxu0 %v87
    %v206 = vpop.f32.mrb[0].mxu0
    %v207 = vadd.f32 0.0, %v206
    %v208 = vpop.f32.mrb[0].mxu0
    %209 = vmatprep.mubr.f32.mxu0 0.0
    %210 = vmatmul.mubr.f32.gmra.mrb[0].mxu0 %v90
    %v211 = vpop.f32.mrb[0].mxu0
    %v212 = vadd.f32 0.0, %v211
    %v213 = vpop.f32.mrb[0].mxu0
    %214 = vmatprep.mubr.f32.mxu0 0.0
    %215 = vmatmul.mubr.f32.gmra.mrb[0].mxu0 %v93
    %v216 = vpop.f32.mrb[0].mxu0
    %v217 = vadd.f32 0.0, %v216
    %v218 = vpop.f32.mrb[0].mxu0
    %219 = vmatprep.mubr.f32.mxu0 0.0
    %220 = vmatmul.mubr.f32.gmra.mrb[0].mxu0 %v96
    %v221 = vpop.f32.mrb[0].mxu0
    %v222 = vadd.f32 0.0, %v221
    %v223 = vpop.f32.mrb[0].mxu0
    %224 = vmatprep.mubr.f32.mxu0 0.0
    %225 = vmatmul.mubr.f32.gmra.mrb[0].mxu0 %v99
    %v226 = vpop.f32.mrb[0].mxu0
    %v227 = vadd.f32 0.0, %v226
    %v228 = vpop.f32.mrb[0].mxu0
    %229 = vmatprep.mubr.f32.mxu0 0.0
    %230 = vmatmul.mubr.f32.gmra.mrb[0].mxu0 %v102
    %v231 = vpop.f32.mrb[0].mxu0
    %v232 = vadd.f32 0.0, %v231
    %v233 = vpop.f32.mrb[0].mxu0
    %234 = vmatprep.mubr.f32.mxu0 0.0
    %235 = vmatmul.mubr.f32.gmra.mrb[0].mxu0 %v105
    %v236 = vpop.f32.mrb[0].mxu0
    %v237 = vadd.f32 0.0, %v236
    %v238 = vpop.f32.mrb[0].mxu0
    %239 = vmatprep.mubr.f32.mxu0 0.0
    %240 = vmatmul.mubr.f32.gmra.mrb[0].mxu0 %v108
    %v241 = vpop.f32.mrb[0].mxu0
    %v242 = vadd.f32 0.0, %v241
    %v243 = vpop.f32.mrb[0].mxu0
    %244 = vmatprep.mubr.f32.mxu0 0.0
    %245 = vmatmul.mubr.f32.gmra.mrb[0].mxu0 %v111
    %v246 = vpop.f32.mrb[0].mxu0
    %v247 = vadd.f32 0.0, %v246
    %v248 = vpop.f32.mrb[0].mxu0
    %249 = vmatprep.mubr.f32.mxu0 0.0
    %250 = vmatmul.mubr.f32.gmra.mrb[0].mxu0 %v114
    %v251 = vpop.f32.mrb[0].mxu0
    %v252 = vadd.f32 0.0, %v251
    %v253 = vpop.f32.mrb[0].mxu0
    %254 = vmatprep.mubr.f32.mxu0 0.0
    %255 = vmatmul.mubr.f32.gmra.mrb[0].mxu0 %v117
    %v256 = vpop.f32.mrb[0].mxu0
    %v257 = vadd.f32 0.0, %v256
    %v258 = vpop.f32.mrb[0].mxu0
    %259 = vmatprep.mubr.f32.mxu0 0.0
    %260 = vmatmul.mubr.f32.gmra.mrb[0].mxu0 %v120
    %v261 = vpop.f32.mrb[0].mxu0
    %v262 = vadd.f32 0.0, %v261
    %v263 = vpop.f32.mrb[0].mxu0
    %264 = vmatprep.mubr.f32.mxu0 0.0
    %265 = vmatmul.mubr.f32.gmra.mrb[0].mxu0 %v123
    %v266 = vpop.f32.mrb[0].mxu0
    %v267 = vadd.f32 0.0, %v266
    %v268 = vpop.f32.mrb[0].mxu0
    %269 = vdwg.mxu0
    %v270 = vmul.f32 %v192, %v192
    %v271 = vmul.f32 %v197, %v197
    %v272 = vmul.f32 %v202, %v202
    %v273 = vmul.f32 %v207, %v207
    %v274 = vmul.f32 %v212, %v212
    %v275 = vmul.f32 %v217, %v217
    %v276 = vmul.f32 %v222, %v222
    %v277 = vmul.f32 %v227, %v227
    %v278 = vmul.f32 %v232, %v232
    %v279 = vmul.f32 %v237, %v237
    %v280 = vmul.f32 %v242, %v242
    %v281 = vmul.f32 %v247, %v247
    %v282 = vmul.f32 %v252, %v252
    %v283 = vmul.f32 %v257, %v257
    %v284 = vmul.f32 %v262, %v262
    %v285 = vmul.f32 %v267, %v267
    %v286 = vadd.f32 %v270, %v271
    %v287 = vadd.f32 %v286, %v272
    %v288 = vadd.f32 %v287, %v273
    %v289 = vadd.f32 %v288, %v274
    %v290 = vadd.f32 %v289, %v275
    %v291 = vadd.f32 %v290, %v276
    %v292 = vadd.f32 %v291, %v277
    %v293 = vadd.f32 %v292, %v278
    %v294 = vadd.f32 %v293, %v279
    %v295 = vadd.f32 %v294, %v280
    %v296 = vadd.f32 %v295, %v281
    %v297 = vadd.f32 %v296, %v282
    %v298 = vadd.f32 %v297, %v283
    %v299 = vadd.f32 %v298, %v284
    %v300 = vadd.f32 %v299, %v285
    %v301 = vrot.slane %v300, 4
    %v302 = vadd.f32 %v300, %v301
    %v303 = vrot.slane %v302, 2
    %v304 = vadd.f32 %v302, %v303
    %v305 = vrot.slane %v304, 1
    %v306 = vadd.f32 %v304, %v305
    %v307 = vmax.f32 %v306, 1e-24
    %v308 = vrsqrt.pop %v307
    %v309 = vmul.f32 %v192, %v308
    %v310 = vmul.f32 %v197, %v308
    %v311 = vmul.f32 %v202, %v308
    %v312 = vmul.f32 %v207, %v308
    %v313 = vmul.f32 %v212, %v308
    %v314 = vmul.f32 %v217, %v308
    %v315 = vmul.f32 %v222, %v308
    %v316 = vmul.f32 %v227, %v308
    %v317 = vmul.f32 %v232, %v308
    %v318 = vmul.f32 %v237, %v308
    %v319 = vmul.f32 %v242, %v308
    %v320 = vmul.f32 %v247, %v308
    %v321 = vmul.f32 %v252, %v308
    %v322 = vmul.f32 %v257, %v308
    %v323 = vmul.f32 %v262, %v308
    %v324 = vmul.f32 %v267, %v308
    %325 = vst [vmem:[#allocation7] sm:$0xff] %v309
    %326 = vst [vmem:[#allocation7 + $0x8] sm:$0xff] %v310
    %327 = vst [vmem:[#allocation7 + $0x10] sm:$0xff] %v311
    %328 = vst [vmem:[#allocation7 + $0x18] sm:$0xff] %v312
    %329 = vst [vmem:[#allocation7 + $0x20] sm:$0xff] %v313
    %330 = vst [vmem:[#allocation7 + $0x28] sm:$0xff] %v314
    %331 = vst [vmem:[#allocation7 + $0x30] sm:$0xff] %v315
    %332 = vst [vmem:[#allocation7 + $0x38] sm:$0xff] %v316
    %333 = vst [vmem:[#allocation7 + $0x40] sm:$0xff] %v317
    %334 = vst [vmem:[#allocation7 + $0x48] sm:$0xff] %v318
    %335 = vst [vmem:[#allocation7 + $0x50] sm:$0xff] %v319
    %336 = vst [vmem:[#allocation7 + $0x58] sm:$0xff] %v320
    %337 = vst [vmem:[#allocation7 + $0x60] sm:$0xff] %v321
    %338 = vst [vmem:[#allocation7 + $0x68] sm:$0xff] %v322
    %339 = vst [vmem:[#allocation7 + $0x70] sm:$0xff] %v323
    %340 = vst [vmem:[#allocation7 + $0x78] sm:$0xff] %v324
    // Predicated region
    $region18: #{tpu_custom_call.1} parent=1 // pred_check
      _
    $region19: #{tpu_custom_call.1} parent=1 // pred_check_branch
      %342 = sbr.rel (0) target = $region21
    $region20: #{tpu_custom_call.1} parent=1 // pred_region
      %s344 = ssub.s32 2048, 2048
      %345 = vsyncadd [#allocation4], %s344
      %s346 = sshll.u32 [#allocation7], 4
      %s347 = int_to_ptr.vmem [resolvable:$true] %s346
      %352 = dma.vmem_to_hbm [thread:$0]  %s347, 2048, %s2, [#allocation4], 128, 128, 8
    $region21: #{tpu_custom_call.1} parent=1 // pred_fallthru
      _
    // Predicated region
    $region22: #{tpu_custom_call.1} parent=1 // pred_check
      _
    $region23: #{tpu_custom_call.1} parent=1 // pred_check_branch
      %354 = sbr.rel (0) target = $region25
    $region24: #{tpu_custom_call.1} parent=1 // pred_region
      %355 = dma.done [#allocation4], 2048
    $region25: #{tpu_custom_call.1} parent=1 // pred_fallthru
      _
    %356 = vsyncpa [#allocation3], 1
    %357 = vsyncpa [#allocation6], 1
    %358 = vsyncpa [#allocation4], 1

</llo_original>
